<compile_context>
chip_gen: v6e
topology: v6e:2x2x1
jax: 0.10.0
libtpu: 0.0.40
codegen_flags: <defaults>
</compile_context>

<pallas_src>
import functools

import jax
import jax.numpy as jnp
from jax.experimental import pallas as pl
from jax.experimental.pallas import tpu as pltpu

_LANES = 128   # lane width of the packed parameter buffer and of the padded class dim
_KH = 3        # conv kernel height, fixed by the module: Conv2d(1, 16, (3, input_dim))


def _round_up(n, m):
    return (n + m - 1) // m * m


def _param_layout(vocab, d, c):
    """Row offsets inside the packed bf16 [rows, 128] parameter buffer.

    All offsets are multiples of 16 so every in-kernel row slice is aligned to the
    bf16 (16, 128) sublane tile.
    """
    v_pad = _round_up(vocab, 16)   # emb rows [vocab, v_pad) are zero; one-hot cols there never fire
    d_pad = _round_up(d, 16)       # conv-slab rows [d, d_pad) are zero; x lanes there are zero
    emb_off = 0
    wc_off = emb_off + v_pad               # [d_pad, 3*C]  conv taps stacked along lanes
    wf_off = wc_off + d_pad                # [C, 128]      folded (hidden1 o out) weight, lanes >= O zero
    cb_off = wf_off + _round_up(c, 16)     # 1 row: conv bias (lanes [:C])
    fb_off = cb_off + 16                   # 1 row: folded bias (lanes [:O]; lanes >= O = -1e30)
    rows = fb_off + 16
    return v_pad, d_pad, emb_off, wc_off, wf_off, cb_off, fb_off, rows


def pack_cnn_params(emb_table, conv_w, conv_b, h1_w, h1_b, out_w, out_b):
    """Pack all model params (PyTorch layouts) into ONE bf16 [rows, 128] buffer.

      emb_table [V, D]   conv_w [C, 1, 3, D]   conv_b [C]
      h1_w [H, C]        h1_b [H]
      out_w [O, H]       out_b [O]

    Perf-review items applied here (call ONCE, off the hot path):
      * hidden1/out folded:  W_fold = h1_w.T @ out_w.T ([C, O]),  b_fold = h1_b @ out_w.T + out_b,
      * 3 conv taps stacked along the LANE axis of a single [D, 3*C] slab (compact K = D,
        no 128-row-per-tap zero padding),
      * whole buffer in bfloat16 (f32 accumulation stays inside the kernel),
      * classes padded to 128 lanes: folded-weight pad columns are 0, pad bias is -1e30,
        so padded classes softmax to ~0 and the output store is lane-dense.
    """
    vocab, d = emb_table.shape
    c = conv_w.shape[0]
    h = h1_w.shape[0]
    o = out_w.shape[0]
    assert conv_w.shape == (c, 1, _KH, d)
    assert d <= _LANES and _KH * c <= _LANES and o <= _LANES and h1_w.shape == (h, c)

    v_pad, d_pad, emb_off, wc_off, wf_off, cb_off, fb_off, rows = _param_layout(vocab, d, c)

    w_fold = h1_w.astype(jnp.float32).T @ out_w.astype(jnp.float32).T          # [C, O]
    b_fold = h1_b.astype(jnp.float32) @ out_w.astype(jnp.float32).T + out_b    # [O]

    p = jnp.zeros((rows, _LANES), jnp.float32)
    p = p.at[emb_off:emb_off + vocab, :d].set(emb_table.astype(jnp.float32))
    for t in range(_KH):                                   # tap t -> lanes [t*C, (t+1)*C)
        p = p.at[wc_off:wc_off + d, t * c:(t + 1) * c].set(conv_w[:, 0, t, :].T.astype(jnp.float32))
    p = p.at[wf_off:wf_off + c, :o].set(w_fold)
    p = p.at[cb_off, :c].set(conv_b.astype(jnp.float32))
    p = p.at[fb_off, :].set(-1e30)                         # padded classes -> prob ~0
    p = p.at[fb_off, :o].set(b_fold)
    return p.astype(jnp.bfloat16)


def cnn_kernel(tok_ref, p_ref, out_ref, *, batch, v_pad, d_pad, c,
               emb_off, wc_off, wf_off, cb_off, fb_off):
    """Whole CNN forward on VMEM-resident tiles (no grid).

    tok_ref : [B*L, 1] int32     flat token-id column
    p_ref   : [rows, 128] bf16   packed parameters (see pack_cnn_params)
    out_ref : [B, 128] f32       softmax probs; classes >= output_dim are ~0
    """
    n_tok = tok_ref.shape[0]
    seq_len = n_tok // batch
    lout = seq_len - _KH + 1

    # 1) Fused embedding lookup as ONE 2-D MXU matmul:
    #    one-hot [B*L, Vpad] @ emb [Vpad, Dpad]   (B*L = 32 is sublane aligned).
    #    The one-hot matmul selects exactly one bf16 row per token, so casting the result
    #    back to bf16 for the next matmul is lossless.
    #    NOTE: out-of-range ids give an all-zero one-hot row (zero embedding) rather than
    #    erroring like nn.Embedding.
    iota_v = jax.lax.broadcasted_iota(jnp.int32, (n_tok, v_pad), 1)
    onehot = (tok_ref[...] == iota_v).astype(jnp.bfloat16)
    x = jnp.dot(onehot, p_ref[emb_off:emb_off + v_pad, :d_pad],
                preferred_element_type=jnp.float32).astype(jnp.bfloat16)      # [B*L, Dpad]

    # 2) Conv2d(1, C, (3, D)) as ONE 2-D matmul with the 3 taps stacked along the lane (N)
    #    axis -- compact K = Dpad (no zero-padded 384-wide contraction), then a cheap
    #    shift-add over time.  y[n, t*C + cc] is tap t applied at flat time position n.
    y = jnp.dot(x, p_ref[wc_off:wc_off + d_pad, :_KH * c],
                preferred_element_type=jnp.float32)                           # [B*L, 3*C]
    conv_bias = p_ref[cb_off:cb_off + 1, :c].astype(jnp.float32)              # [1, C]

    # 3) Per-batch shift-add + conv bias + ReLU + global max-pool over time.
    #    Static slices keep everything 2-D (no in-kernel reshapes); B is tiny so this unrolls.
    pooled_rows = []
    for b in range(batch):
        r0 = b * seq_len
        conv_act = (y[r0:r0 + lout, 0:c]
                    + y[r0 + 1:r0 + 1 + lout, c:2 * c]
                    + y[r0 + 2:r0 + 2 + lout, 2 * c:3 * c]
                    + conv_bias)                                              # [Lout, C]
        pooled_rows.append(jnp.max(jnp.maximum(conv_act, 0.0), axis=0, keepdims=True))
    pooled = jnp.concatenate(pooled_rows, axis=0)                             # [B, C]

    # 4) Folded (hidden1 -> out) linear; classes padded to 128 lanes (pad bias = -1e30).
    logits = jnp.dot(pooled, p_ref[wf_off:wf_off + c, :].astype(jnp.float32),
                     preferred_element_type=jnp.float32)                      # [B, 128]
    logits = logits + p_ref[fb_off:fb_off + 1, :].astype(jnp.float32)

    # 5) Softmax over the lane-dense padded class dim (padded classes underflow to 0).
    m = jnp.max(logits, axis=-1, keepdims=True)
    e = jnp.exp(logits - m)
    out_ref[...] = e * pl.reciprocal(jnp.sum(e, axis=-1, keepdims=True), approx=True)


@functools.partial(jax.jit, static_argnames=("vocab", "d", "c", "o", "unpad"))
def cnn_forward(tokens, packed_params, *, vocab, d, c, o, unpad=True):
    """tokens [B, L] int32, packed_params from pack_cnn_params -> softmax probs.

    Returns [B, o] if unpad=True, else the lane-dense padded [B, 128] block (padded classes
    ~0) so downstream consumers can skip the extra tiny XLA slice op (the kernel is
    launch-overhead bound at small B).
    """
    batch, seq_len = tokens.shape
    v_pad, d_pad, emb_off, wc_off, wf_off, cb_off, fb_off, rows = _param_layout(vocab, d, c)
    assert packed_params.shape == (rows, _LANES)

    kernel = functools.partial(
        cnn_kernel, batch=batch, v_pad=v_pad, d_pad=d_pad, c=c,
        emb_off=emb_off, wc_off=wc_off, wf_off=wf_off, cb_off=cb_off, fb_off=fb_off)

    n_tok = batch * seq_len
    cost = pl.CostEstimate(
        flops=2 * (n_tok * v_pad * d_pad + n_tok * d_pad * _KH * c + batch * c * _LANES),
        transcendentals=batch * _LANES,
        bytes_accessed=n_tok * 4 + rows * _LANES * 2 + batch * _LANES * 4)

    vmem = pl.BlockSpec(memory_space=pltpu.MemorySpace.VMEM)
    probs_padded = pl.pallas_call(
        kernel,
        out_shape=jax.ShapeDtypeStruct((batch, _LANES), jnp.float32),
        in_specs=[vmem, vmem],
        out_specs=vmem,
        cost_estimate=cost,
        # No grid: tokens + ~28 KiB packed params + a few KiB of intermediates are trivially
        # VMEM-resident; the call is pure launch/DMA-latency bound.  To scale the batch:
        # add a batch grid axis with dimension_semantics=("parallel",) (shards across both
        # v7x TensorCores), give the packed params an index_map that always returns block 0
        # so they stay resident, and size the batch tile against v7x's 64 MiB physical /
        # 32 MiB scoped VMEM (dominant live tensors: the one-hot [Bt*L, Vpad] and conv
        # activations), not the 128 MiB available on v5e/v6e.
    )(tokens.reshape(n_tok, 1).astype(jnp.int32), packed_params)
    return probs_padded[:, :o] if unpad else probs_padded


if __name__ == "__main__":
    # Small shapes consistent with the module's forward:
    #   vocab=20, input_dim D=32, max_len L=16, conv channels C=16 (fixed by the module),
    #   hidden H=32, output O=2, batch B=2.
    B, L = 2, 16
    VOCAB, D = 20, 32
    C, H, O = 16, 32, 2

    key = jax.random.PRNGKey(0)
    ks = jax.random.split(key, 8)
    emb_table = jax.random.normal(ks[0], (VOCAB, D), jnp.float32) * 0.1
    conv_w = jax.random.normal(ks[1], (C, 1, 3, D), jnp.float32) * 0.1   # PyTorch Conv2d layout
    conv_b = jax.random.normal(ks[2], (C,), jnp.float32) * 0.1
    h1_w = jax.random.normal(ks[3], (H, C), jnp.float32) * 0.1           # PyTorch Linear [out, in]
    h1_b = jax.random.normal(ks[4], (H,), jnp.float32) * 0.1
    out_w = jax.random.normal(ks[5], (O, H), jnp.float32) * 0.1
    out_b = jax.random.normal(ks[6], (O,), jnp.float32) * 0.1
    tokens = jax.random.randint(ks[7], (B, L), 0, VOCAB, jnp.int32)      # sen_batch (int ids)

    params = jax.block_until_ready(
        pack_cnn_params(emb_table, conv_w, conv_b, h1_w, h1_b, out_w, out_b))

    out = cnn_forward(tokens, params, vocab=VOCAB, d=D, c=C, o=O)
    out = jax.block_until_ready(out)

    # Pure-JAX f32 reference with PyTorch semantics.
    Lout = L - 3 + 1
    x = jnp.take(emb_table, tokens, axis=0)                              # [B, L, D]
    conv_ref = sum(jnp.einsum("bld,cd->blc", x[:, t:t + Lout, :], conv_w[:, 0, t, :])
                   for t in range(3)) + conv_b
    pooled_ref = jnp.max(jax.nn.relu(conv_ref), axis=1)                  # [B, C]
    logits_ref = (pooled_ref @ h1_w.T + h1_b) @ out_w.T + out_b
    ref = jax.nn.softmax(logits_ref, axis=-1)

    assert out.shape == (B, O)
    # Tolerance covers bf16 parameter storage + the EUP approximate reciprocal in softmax.
    assert jnp.allclose(out, ref, atol=5e-3, rtol=5e-3), (out, ref)

    print("KERNEL_OK")
</pallas_src>

<mosaic_0001>
module attributes {stable_mosaic.version = 11 : i64} {
  func.func @cnn_kernel(%arg0: memref<32x1xi32, #tpu.memory_space<vmem>>, %arg1: memref<112x128xbf16, #tpu.memory_space<vmem>>, %arg2: memref<2x128xf32, #tpu.memory_space<vmem>>) attributes {dimension_semantics = [], scalar_prefetch = 0 : i64, scratch_operands = 0 : i64, tpu.core_type = #tpu.core_type<tc>} {
    %0 = tpu.iota {dimensions = array<i32: 1>} : vector<32x32xi32>
    %c0 = arith.constant 0 : index
    %c0_0 = arith.constant 0 : index
    %1 = vector.load %arg0[%c0, %c0_0] : memref<32x1xi32, #tpu.memory_space<vmem>>, vector<32x1xi32>
    %2 = vector.broadcast %1 : vector<32x1xi32> to vector<32x32xi32>
    %3 = arith.cmpi eq, %2, %0 : vector<32x32xi32>
    %4 = arith.extui %3 : vector<32x32xi1> to vector<32x32xi32>
    %5 = arith.sitofp %4 : vector<32x32xi32> to vector<32x32xf32>
    %6 = arith.truncf %5 : vector<32x32xf32> to vector<32x32xbf16>
    %c0_1 = arith.constant 0 : index
    %c0_2 = arith.constant 0 : index
    %7 = vector.load %arg1[%c0_1, %c0_2] : memref<112x128xbf16, #tpu.memory_space<vmem>>, vector<32x32xbf16>
    %cst = arith.constant dense<0.000000e+00> : vector<32x32xf32>
    %8 = tpu.matmul %6, %7, %cst {dimension_numbers = #tpu.dot_dimension_numbers<[1], [0], [0], [1], [0, 0, 1, 1], [], []>} : vector<32x32xbf16>, vector<32x32xbf16>, vector<32x32xf32> -> vector<32x32xf32>
    %9 = arith.truncf %8 : vector<32x32xf32> to vector<32x32xbf16>
    %c32 = arith.constant 32 : index
    %c0_3 = arith.constant 0 : index
    %10 = vector.load %arg1[%c32, %c0_3] : memref<112x128xbf16, #tpu.memory_space<vmem>>, vector<32x48xbf16>
    %cst_4 = arith.constant dense<0.000000e+00> : vector<32x48xf32>
    %11 = tpu.matmul %9, %10, %cst_4 {dimension_numbers = #tpu.dot_dimension_numbers<[1], [0], [0], [1], [0, 0, 1, 1], [], []>} : vector<32x32xbf16>, vector<32x48xbf16>, vector<32x48xf32> -> vector<32x48xf32>
    %c80 = arith.constant 80 : index
    %c0_5 = arith.constant 0 : index
    %12 = vector.load %arg1[%c80, %c0_5] : memref<112x128xbf16, #tpu.memory_space<vmem>>, vector<1x16xbf16>
    %13 = arith.extf %12 : vector<1x16xbf16> to vector<1x16xf32>
    %14 = vector.extract_strided_slice %11 {offsets = [0, 0], sizes = [14, 16], strides = [1, 1]} : vector<32x48xf32> to vector<14x16xf32>
    %15 = vector.extract_strided_slice %11 {offsets = [1, 16], sizes = [14, 16], strides = [1, 1]} : vector<32x48xf32> to vector<14x16xf32>
    %16 = arith.addf %14, %15 : vector<14x16xf32>
    %17 = vector.extract_strided_slice %11 {offsets = [2, 32], sizes = [14, 16], strides = [1, 1]} : vector<32x48xf32> to vector<14x16xf32>
    %18 = arith.addf %16, %17 : vector<14x16xf32>
    %19 = vector.broadcast %13 : vector<1x16xf32> to vector<14x16xf32>
    %20 = arith.addf %18, %19 : vector<14x16xf32>
    %cst_6 = arith.constant 0.000000e+00 : f32
    %21 = vector.broadcast %cst_6 : f32 to vector<14x16xf32>
    %22 = arith.maximumf %20, %21 : vector<14x16xf32>
    %cst_7 = arith.constant dense<0xFF800000> : vector<16xf32>
    %23 = vector.multi_reduction <maximumf>, %22, %cst_7 [0] : vector<14x16xf32> to vector<16xf32>
    %24 = vector.shape_cast %23 : vector<16xf32> to vector<1x16xf32>
    %25 = vector.extract_strided_slice %11 {offsets = [16, 0], sizes = [14, 16], strides = [1, 1]} : vector<32x48xf32> to vector<14x16xf32>
    %26 = vector.extract_strided_slice %11 {offsets = [17, 16], sizes = [14, 16], strides = [1, 1]} : vector<32x48xf32> to vector<14x16xf32>
    %27 = arith.addf %25, %26 : vector<14x16xf32>
    %28 = vector.extract_strided_slice %11 {offsets = [18, 32], sizes = [14, 16], strides = [1, 1]} : vector<32x48xf32> to vector<14x16xf32>
    %29 = arith.addf %27, %28 : vector<14x16xf32>
    %30 = vector.broadcast %13 : vector<1x16xf32> to vector<14x16xf32>
    %31 = arith.addf %29, %30 : vector<14x16xf32>
    %cst_8 = arith.constant 0.000000e+00 : f32
    %32 = vector.broadcast %cst_8 : f32 to vector<14x16xf32>
    %33 = arith.maximumf %31, %32 : vector<14x16xf32>
    %cst_9 = arith.constant dense<0xFF800000> : vector<16xf32>
    %34 = vector.multi_reduction <maximumf>, %33, %cst_9 [0] : vector<14x16xf32> to vector<16xf32>
    %35 = vector.shape_cast %34 : vector<16xf32> to vector<1x16xf32>
    %36 = tpu.concatenate %24, %35 in 0 : vector<1x16xf32>, vector<1x16xf32> -> vector<2x16xf32>
    %c64 = arith.constant 64 : index
    %c0_10 = arith.constant 0 : index
    %37 = vector.load %arg1[%c64, %c0_10] : memref<112x128xbf16, #tpu.memory_space<vmem>>, vector<16x128xbf16>
    %38 = arith.extf %37 : vector<16x128xbf16> to vector<16x128xf32>
    %cst_11 = arith.constant dense<0.000000e+00> : vector<2x128xf32>
    %39 = tpu.matmul %36, %38, %cst_11 {dimension_numbers = #tpu.dot_dimension_numbers<[1], [0], [0], [1], [0, 0, 1, 1], [], []>} : vector<2x16xf32>, vector<16x128xf32>, vector<2x128xf32> -> vector<2x128xf32>
    %c96 = arith.constant 96 : index
    %c0_12 = arith.constant 0 : index
    %40 = vector.load %arg1[%c96, %c0_12] : memref<112x128xbf16, #tpu.memory_space<vmem>>, vector<1x128xbf16>
    %41 = arith.extf %40 : vector<1x128xbf16> to vector<1x128xf32>
    %42 = vector.broadcast %41 : vector<1x128xf32> to vector<2x128xf32>
    %43 = arith.addf %39, %42 : vector<2x128xf32>
    %cst_13 = arith.constant dense<0xFF800000> : vector<2xf32>
    %44 = vector.multi_reduction <maximumf>, %43, %cst_13 [1] : vector<2x128xf32> to vector<2xf32>
    %45 = vector.shape_cast %44 : vector<2xf32> to vector<2x1xf32>
    %46 = vector.broadcast %45 : vector<2x1xf32> to vector<2x128xf32>
    %47 = arith.subf %43, %46 : vector<2x128xf32>
    %48 = math.exp %47 : vector<2x128xf32>
    %cst_14 = arith.constant dense<0.000000e+00> : vector<2xf32>
    %49 = vector.multi_reduction <add>, %48, %cst_14 [1] : vector<2x128xf32> to vector<2xf32>
    %50 = vector.shape_cast %49 : vector<2xf32> to vector<2x1xf32>
    %51 = tpu.reciprocal %50 {approx = true} : vector<2x1xf32> -> vector<2x1xf32>
    %52 = vector.broadcast %51 : vector<2x1xf32> to vector<2x128xf32>
    %53 = arith.mulf %48, %52 : vector<2x128xf32>
    %c0_15 = arith.constant 0 : index
    %c0_16 = arith.constant 0 : index
    %54 = vector.load %arg2[%c0_15, %c0_16] : memref<2x128xf32, #tpu.memory_space<vmem>>, vector<2x128xf32>
    tpu.vector_store %arg2[%c0_15, %c0_16], %53 {strides = array<i32>} : memref<2x128xf32, #tpu.memory_space<vmem>>, vector<2x128xf32>,
    return
  }
}

</mosaic_0001>

<llo_original>
// kernel: cnn_forward.1
$region0: #{cnn_forward.1}
  #allocation0 [shape = 'u32[]', space=smem, size = 0x4, offset = 0x4, fixed_abs, tag = 'smem constant byte address 0x4 - core index']
  #allocation1 [shape = 'u32[144,128]{1,0:T(1,128)}', space=vmem, size = 0x12000, scoped, tag = 'internal scratch']
  %s0 = inlined_call_operand.vmem [shape: s32[32,1], index: 0, kind: input, shape index: {}]
  %s1 = inlined_call_operand.hbm [shape: bf16[112,128], index: 1, kind: input, shape index: {}]
  %s2 = inlined_call_operand.hbm [shape: f32[2,128], index: 2, kind: output, shape index: {}]
  %s3 = sld [smem:[#allocation0]]
  $region22: #{cnn_forward.1} parent=0
    _
  %s5 = ssub.s32 1, %s3
  %s6 = scalar_select 0, %s5, %s3
  $region1: #{cnn_forward.1} parent=0
    #allocation2 [shape = 'u8[28672]{0}', space=vmem, size = 0x7000, scoped, tag = 'input window, operand 1, single buffered']
    #allocation3 [shape = 's32[1]{0}', space=sflag, size = 0x4, scoped, tag = 'scoped memory for cnn_forward.1']
    #allocation4 [shape = 's32[1]{0}', space=sflag, size = 0x4, scoped, tag = 'scoped memory for cnn_forward.1']
    #allocation5 [shape = 'u8[1024]{0}', space=vmem, size = 0x400, scoped, tag = 'output window, operand 0, single buffered']
    %7 = vsyncpa [#allocation3], 0
    %8 = vsyncpa [#allocation4], 0
    // Predicated region
    $region2: #{cnn_forward.1} parent=1 // pred_check
      _
    $region3: #{cnn_forward.1} parent=1 // pred_check_branch
      %10 = sbr.rel (0) target = $region5
    $region4: #{cnn_forward.1} parent=1 // pred_region
      _
    $region5: #{cnn_forward.1} parent=1 // pred_fallthru
      _
    // Predicated region
    $region6: #{cnn_forward.1} parent=1 // pred_check
      _
    $region7: #{cnn_forward.1} parent=1 // pred_check_branch
      %12 = sbr.rel (0) target = $region9
    $region8: #{cnn_forward.1} parent=1 // pred_region
      %s14 = ssub.s32 896, 896
      %15 = vsyncadd [#allocation3], %s14
      %s16 = sshll.u32 [#allocation2], 4
      %s17 = int_to_ptr.vmem [resolvable:$true] %s16
      %22 = dma.hbm_to_vmem [thread:$0]  %s1, 896, %s17, [#allocation3], 64, 64, 4
    $region9: #{cnn_forward.1} parent=1 // pred_fallthru
      _
    // Predicated region
    $region10: #{cnn_forward.1} parent=1 // pred_check
      _
    $region11: #{cnn_forward.1} parent=1 // pred_check_branch
      %24 = sbr.rel (0) target = $region13
    $region12: #{cnn_forward.1} parent=1 // pred_region
      %25 = dma.done [#allocation3], 896
    $region13: #{cnn_forward.1} parent=1 // pred_fallthru
      _
    %v27 = vlaneseq
    %v28 = vand.u32 %v27, 127
    %v29 = vld [vmem:[%s0] sm:$0xff]
    %v30 = vld [vmem:[%s0 + $0x8] sm:$0xff]
    %v31 = vld [vmem:[%s0 + $0x10] sm:$0xff]
    %v32 = vld [vmem:[%s0 + $0x18] sm:$0xff]
    %33 = vset.pattern.permute.xlu0 0
    %34 = vperm.xlu0 %33, %v29
    %v35 = vpop.permute.xlu0 %34
    %36 = vset.pattern.permute.xlu0 0
    %37 = vperm.xlu0 %36, %v30
    %v38 = vpop.permute.xlu0 %37
    %39 = vset.pattern.permute.xlu0 0
    %40 = vperm.xlu0 %39, %v31
    %v41 = vpop.permute.xlu0 %40
    %42 = vset.pattern.permute.xlu0 0
    %43 = vperm.xlu0 %42, %v32
    %v44 = vpop.permute.xlu0 %43
    %vm45 = vcmp.eq.s32.totalorder %v35, %v28
    %vm46 = vcmp.eq.s32.totalorder %v38, %v28
    %vm47 = vcmp.eq.s32.totalorder %v41, %v28
    %vm48 = vcmp.eq.s32.totalorder %v44, %v28
    %v49 = vsel %vm45, 1, 0
    %v50 = vsel %vm46, 1, 0
    %v51 = vsel %vm47, 1, 0
    %v52 = vsel %vm48, 1, 0
    %v53 = vcvt.s32.f32 %v49
    %v54 = vcvt.s32.f32 %v50
    %v55 = vcvt.s32.f32 %v51
    %v56 = vcvt.s32.f32 %v52
    %v57 = vpack.c.bf16 %v54, %v53
    %v58 = vpack.c.bf16 %v56, %v55
    %v59 = vld [vmem:[#allocation2] sm:$0xf]
    %v60 = vld [vmem:[#allocation2 + $0x4] sm:$0xf]
    %v61 = vld [vmem:[#allocation2 + $0x8] sm:$0xf]
    %v62 = vld [vmem:[#allocation2 + $0xc] sm:$0xf]
    %v67 = vunpack.c.l.b16 %v59
    %v68 = vunpack.c.l.b16 %v60
    %v69 = vunpack.c.l.b16 %v61
    %v70 = vunpack.c.l.b16 %v62
    %v71 = vpack.c.b16 %v68, %v67
    %v72 = vpack.c.b16 %v70, %v69
    %vm75 = vcmask 261120
    %v77 = vsel %vm75, %v57, 0
    %v80 = vsel %vm75, %v58, 0
    %82 = vmatprep.subr.bf16.mxu0 0
    %83 = vmatpush1.bf16.msra.mxu0 0
    %84 = vmatprep.subr.bf16.mxu0 0
    %85 = vmatpush1.bf16.msra.mxu0 0
    %86 = vmatprep.subr.bf16.mxu0 0
    %87 = vmatpush1.bf16.msra.mxu0 0
    %88 = vmatprep.subr.bf16.mxu0 0
    %89 = vmatpush1.bf16.msra.mxu0 0
    %90 = vmatprep.subr.bf16.mxu0 0
    %91 = vmatpush1.bf16.msra.mxu0 0
    %92 = vmatprep.subr.bf16.mxu0 0
    %93 = vmatpush1.bf16.msra.mxu0 0
    %94 = vmatprep.subr.bf16.mxu0 0
    %95 = vmatpush1.bf16.msra.mxu0 %v72
    %96 = vmatprep.subr.bf16.mxu0 0
    %97 = vmatpush1.bf16.msra.mxu0 %v71
    %98 = vmatprep.subr.bf16.mxu0 0
    %99 = vmatpush2.bf16.msra.mxu0 0
    %100 = vmatprep.subr.bf16.mxu0 0
    %101 = vmatpush2.bf16.msra.mxu0 0
    %102 = vmatprep.subr.bf16.mxu0 0
    %103 = vmatpush2.bf16.msra.mxu0 0
    %104 = vmatprep.subr.bf16.mxu0 0
    %105 = vmatpush2.bf16.msra.mxu0 0
    %106 = vmatprep.subr.bf16.mxu0 0
    %107 = vmatpush2.bf16.msra.mxu0 0
    %108 = vmatprep.subr.bf16.mxu0 0
    %109 = vmatpush2.bf16.msra.mxu0 0
    %110 = vmatprep.subr.bf16.mxu0 0
    %111 = vmatpush2.bf16.msra.mxu0 0
    %112 = vmatprep.subr.bf16.mxu0 0
    %113 = vmatpush2.bf16.msra.mxu0 0
    %114 = vmatprep.mubr.bf16.mxu0 0
    %115 = vmatmul.mubr.bf16.gmra.mxu0 %v77
    %v116 = vpop.f32.mrf.mxu0
    %v117 = vadd.f32 0.0, %v116
    %v118 = vpop.f32.mrf.mxu0
    %v119 = vpop.f32.mrf.mxu0
    %v120 = vadd.f32 0.0, %v119
    %v121 = vpop.f32.mrf.mxu0
    %122 = vmatprep.mubr.bf16.mxu0 0
    %123 = vmatmul.mubr.bf16.gmra.mxu0 %v80
    %v124 = vpop.f32.mrf.mxu0
    %v125 = vadd.f32 0.0, %v124
    %v126 = vpop.f32.mrf.mxu0
    %v127 = vpop.f32.mrf.mxu0
    %v128 = vadd.f32 0.0, %v127
    %v129 = vpop.f32.mrf.mxu0
    %130 = vdwg.mxu0
    %v131 = vpack.c.bf16 %v120, %v117
    %v132 = vpack.c.bf16 %v128, %v125
    %v133 = vld [vmem:[#allocation2 + $0x10] sm:$0xf]
    %v134 = vld [vmem:[#allocation2 + $0x14] sm:$0xf]
    %v135 = vld [vmem:[#allocation2 + $0x18] sm:$0xf]
    %v136 = vld [vmem:[#allocation2 + $0x1c] sm:$0xf]
    %v141 = vunpack.c.l.b16 %v133
    %v142 = vunpack.c.l.b16 %v134
    %v143 = vunpack.c.l.b16 %v135
    %v144 = vunpack.c.l.b16 %v136
    %v145 = vpack.c.b16 %v142, %v141
    %v146 = vpack.c.b16 %v144, %v143
    %v150 = vsel %vm75, %v131, 0
    %v153 = vsel %vm75, %v132, 0
    %155 = vmatprep.subr.bf16.mxu0 0
    %156 = vmatpush1.bf16.msra.mxu0 0
    %157 = vmatprep.subr.bf16.mxu0 0
    %158 = vmatpush1.bf16.msra.mxu0 0
    %159 = vmatprep.subr.bf16.mxu0 0
    %160 = vmatpush1.bf16.msra.mxu0 0
    %161 = vmatprep.subr.bf16.mxu0 0
    %162 = vmatpush1.bf16.msra.mxu0 0
    %163 = vmatprep.subr.bf16.mxu0 0
    %164 = vmatpush1.bf16.msra.mxu0 0
    %165 = vmatprep.subr.bf16.mxu0 0
    %166 = vmatpush1.bf16.msra.mxu0 0
    %167 = vmatprep.subr.bf16.mxu0 0
    %168 = vmatpush1.bf16.msra.mxu0 %v146
    %169 = vmatprep.subr.bf16.mxu0 0
    %170 = vmatpush1.bf16.msra.mxu0 %v145
    %171 = vmatprep.subr.bf16.mxu0 0
    %172 = vmatpush2.bf16.msra.mxu0 0
    %173 = vmatprep.subr.bf16.mxu0 0
    %174 = vmatpush2.bf16.msra.mxu0 0
    %175 = vmatprep.subr.bf16.mxu0 0
    %176 = vmatpush2.bf16.msra.mxu0 0
    %177 = vmatprep.subr.bf16.mxu0 0
    %178 = vmatpush2.bf16.msra.mxu0 0
    %179 = vmatprep.subr.bf16.mxu0 0
    %180 = vmatpush2.bf16.msra.mxu0 0
    %181 = vmatprep.subr.bf16.mxu0 0
    %182 = vmatpush2.bf16.msra.mxu0 0
    %183 = vmatprep.subr.bf16.mxu0 0
    %184 = vmatpush2.bf16.msra.mxu0 0
    %185 = vmatprep.subr.bf16.mxu0 0
    %186 = vmatpush2.bf16.msra.mxu0 0
    %187 = vmatprep.mubr.bf16.mxu0 0
    %188 = vmatmul.mubr.bf16.gmra.mxu0 %v150
    %v189 = vpop.f32.mrf.mxu0
    %v190 = vadd.f32 0.0, %v189
    %v191 = vpop.f32.mrf.mxu0
    %v192 = vpop.f32.mrf.mxu0
    %v193 = vadd.f32 0.0, %v192
    %v194 = vpop.f32.mrf.mxu0
    %195 = vmatprep.mubr.bf16.mxu0 0
    %196 = vmatmul.mubr.bf16.gmra.mxu0 %v153
    %v197 = vpop.f32.mrf.mxu0
    %v198 = vadd.f32 0.0, %v197
    %v199 = vpop.f32.mrf.mxu0
    %v200 = vpop.f32.mrf.mxu0
    %v201 = vadd.f32 0.0, %v200
    %v202 = vpop.f32.mrf.mxu0
    %203 = vdwg.mxu0
    %v204 = vld [vmem:[#allocation2 + $0x28] sm:$0x1]
    %v205 = vunpack.c.l.bf16 %v204
    %vm208 = vcmask 1046528
    %v209 = vrot.slane %v190, 1
    %v210 = vrot.slane %v193, 1
    %v211 = vsel %vm208, %v209, %v210
    %212 = vrot.lane.b32.xlu0 %v211, 112
    %v213 = vpop.permute.xlu0 %212
    %214 = vrot.lane.b32.xlu0 %v210, 112
    %v215 = vpop.permute.xlu0 %214
    %v218 = vadd.f32 %v190, %v213
    %v219 = vadd.f32 %v193, %v215
    %vm220 = vcmask 1045504
    %v221 = vrot.slane %v190, 2
    %v222 = vrot.slane %v193, 2
    %v223 = vsel %vm220, %v221, %v222
    %224 = vrot.lane.b32.xlu0 %v223, 96
    %v225 = vpop.permute.xlu0 %224
    %226 = vrot.lane.b32.xlu0 %v222, 96
    %v227 = vpop.permute.xlu0 %226
    %v230 = vadd.f32 %v218, %v225
    %v231 = vadd.f32 %v219, %v227
    %v232 = vlaneseq
    %v233 = vshrl.u32 %v232, 7
    %v234 = vsub.s32 0, %v233
    %v235 = vrot.slane %v205, %v234
    %v236 = vadd.f32 %v230, %v235
    %v237 = vadd.f32 %v231, %v235
    %v238 = vmax.f32 %v236, 0.0
    %v239 = vmax.f32 %v237, 0.0
    %vm240 = vcmask 130048
    %v241 = vsel %vm240, %v238, -inf
    %vm242 = vcmask 128000
    %v243 = vsel %vm242, %v239, -inf
    %v244 = vmax.f32 %v241, %v243
    %v245 = vrot.slane %v244, 4
    %v246 = vmax.f32 %v244, %v245
    %v247 = vrot.slane %v246, 2
    %v248 = vmax.f32 %v246, %v247
    %v249 = vrot.slane %v248, 1
    %v250 = vmax.f32 %v248, %v249
    %v253 = vrot.slane %v198, 1
    %v254 = vrot.slane %v201, 1
    %v255 = vsel %vm208, %v253, %v254
    %256 = vrot.lane.b32.xlu0 %v255, 112
    %v257 = vpop.permute.xlu0 %256
    %258 = vrot.lane.b32.xlu0 %v254, 112
    %v259 = vpop.permute.xlu0 %258
    %v262 = vadd.f32 %v198, %v257
    %v263 = vadd.f32 %v201, %v259
    %v264 = vrot.slane %v198, 2
    %v265 = vrot.slane %v201, 2
    %v266 = vsel %vm220, %v264, %v265
    %267 = vrot.lane.b32.xlu0 %v266, 96
    %v268 = vpop.permute.xlu0 %267
    %269 = vrot.lane.b32.xlu0 %v265, 96
    %v270 = vpop.permute.xlu0 %269
    %v273 = vadd.f32 %v262, %v268
    %v274 = vadd.f32 %v263, %v270
    %v275 = vadd.f32 %v273, %v235
    %v276 = vadd.f32 %v274, %v235
    %v277 = vmax.f32 %v275, 0.0
    %v278 = vmax.f32 %v276, 0.0
    %v279 = vsel %vm240, %v277, -inf
    %v280 = vsel %vm242, %v278, -inf
    %v281 = vmax.f32 %v279, %v280
    %v282 = vrot.slane %v281, 4
    %v283 = vmax.f32 %v281, %v282
    %v284 = vrot.slane %v283, 2
    %v285 = vmax.f32 %v283, %v284
    %v286 = vrot.slane %v285, 1
    %v287 = vmax.f32 %v285, %v286
    %vm288 = vcmask 1040384
    %v289 = vsel %vm288, %v250, %v287
    %v290 = vld [vmem:[#allocation2 + $0x20] sm:$0xf]
    %v291 = vld [vmem:[#allocation2 + $0x24] sm:$0xf]
    %v292 = vunpack.c.l.bf16 %v290
    %v293 = vunpack.c.l.bf16 %v291
    %v294 = vld [vmem:[#allocation2 + $0x30] sm:$0x1]
    %v295 = vunpack.c.l.bf16 %v294
    %v296 = vlaneseq
    %v297 = vshrl.u32 %v296, 7
    %v298 = vsub.s32 0, %v297
    %v299 = vrot.slane %v295, %v298
    %v301 = vsel %vm240, %v289, 0
    %303 = vmatprep.subr.mxu0 0.0
    %304 = vmatpush1.msra.mxu0 0.0
    %305 = vmatprep.subr.mxu0 0.0
    %306 = vmatpush1.msra.mxu0 0.0
    %307 = vmatprep.subr.mxu0 0.0
    %308 = vmatpush1.msra.mxu0 0.0
    %309 = vmatprep.subr.mxu0 0.0
    %310 = vmatpush1.msra.mxu0 0.0
    %311 = vmatprep.subr.mxu0 0.0
    %312 = vmatpush1.msra.mxu0 0.0
    %313 = vmatprep.subr.mxu0 0.0
    %314 = vmatpush1.msra.mxu0 0.0
    %315 = vmatprep.subr.mxu0 0.0
    %316 = vmatpush1.msra.mxu0 0.0
    %317 = vmatprep.subr.mxu0 0.0
    %318 = vmatpush1.msra.mxu0 0.0
    %319 = vmatprep.subr.mxu0 0.0
    %320 = vmatpush1.msra.mxu0 0.0
    %321 = vmatprep.subr.mxu0 0.0
    %322 = vmatpush1.msra.mxu0 0.0
    %323 = vmatprep.subr.mxu0 0.0
    %324 = vmatpush1.msra.mxu0 0.0
    %325 = vmatprep.subr.mxu0 0.0
    %326 = vmatpush1.msra.mxu0 0.0
    %327 = vmatprep.subr.mxu0 0.0
    %328 = vmatpush1.msra.mxu0 0.0
    %329 = vmatprep.subr.mxu0 0.0
    %330 = vmatpush1.msra.mxu0 0.0
    %331 = vmatprep.subr.mxu0 0.0
    %332 = vmatpush1.msra.mxu0 %v293
    %333 = vmatprep.subr.mxu0 0.0
    %334 = vmatpush1.msra.mxu0 %v292
    %335 = vmatprep.subr.mxu0 0.0
    %336 = vmatpush2.msra.mxu0 0.0
    %337 = vmatprep.subr.mxu0 0.0
    %338 = vmatpush2.msra.mxu0 0.0
    %339 = vmatprep.subr.mxu0 0.0
    %340 = vmatpush2.msra.mxu0 0.0
    %341 = vmatprep.subr.mxu0 0.0
    %342 = vmatpush2.msra.mxu0 0.0
    %343 = vmatprep.subr.mxu0 0.0
    %344 = vmatpush2.msra.mxu0 0.0
    %345 = vmatprep.subr.mxu0 0.0
    %346 = vmatpush2.msra.mxu0 0.0
    %347 = vmatprep.subr.mxu0 0.0
    %348 = vmatpush2.msra.mxu0 0.0
    %349 = vmatprep.subr.mxu0 0.0
    %350 = vmatpush2.msra.mxu0 0.0
    %351 = vmatprep.subr.mxu0 0.0
    %352 = vmatpush2.msra.mxu0 0.0
    %353 = vmatprep.subr.mxu0 0.0
    %354 = vmatpush2.msra.mxu0 0.0
    %355 = vmatprep.subr.mxu0 0.0
    %356 = vmatpush2.msra.mxu0 0.0
    %357 = vmatprep.subr.mxu0 0.0
    %358 = vmatpush2.msra.mxu0 0.0
    %359 = vmatprep.subr.mxu0 0.0
    %360 = vmatpush2.msra.mxu0 0.0
    %361 = vmatprep.subr.mxu0 0.0
    %362 = vmatpush2.msra.mxu0 0.0
    %363 = vmatprep.subr.mxu0 0.0
    %364 = vmatpush2.msra.mxu0 0.0
    %365 = vmatprep.subr.mxu0 0.0
    %366 = vmatpush2.msra.mxu0 0.0
    %367 = vmatprep.mubr.f32.mxu0 0.0
    %368 = vmatmul.mubr.f32.gmra.mxu0 %v301
    %v369 = vpop.f32.mrf.mxu0
    %v370 = vadd.f32 %v299, %v369
    %v371 = vpop.f32.mrf.mxu0
    %372 = vdwg.mxu0
    %vm373 = vcmask 1041408
    %v374 = vsel %vm373, %v370, -inf
    %375 = vmax.xlane.f32.xlu0 %v374
    %v376 = vpop.xlane.xlu0 %375
    %v377 = vsub.f32 %v370, %v376
    %v378 = vmul.f32 %v377, 1.442695
    %v379 = vpow.pop %v378
    %v380 = vsel %vm373, %v379, 0.0
    %381 = vadd.xlane.f32.xlu0 %v380
    %v382 = vpop.xlane.xlu0 %381
    %v383 = vrcp.pop %v382
    %v384 = vmul.f32 %v379, %v383
    %385 = vst [vmem:[#allocation5] sm:$0x3] %v384
    // Predicated region
    $region14: #{cnn_forward.1} parent=1 // pred_check
      _
    $region15: #{cnn_forward.1} parent=1 // pred_check_branch
      %387 = sbr.rel (0) target = $region17
    $region16: #{cnn_forward.1} parent=1 // pred_region
      %s389 = ssub.s32 32, 32
      %390 = vsyncadd [#allocation4], %s389
      %s392 = sshll.u32 [#allocation5], 4
      %s393 = int_to_ptr.vmem [resolvable:$true] %s392
      %395 = dma.vmem_to_hbm [thread:$0]  %s393, 32, %s2, [#allocation4]
    $region17: #{cnn_forward.1} parent=1 // pred_fallthru
      _
    // Predicated region
    $region18: #{cnn_forward.1} parent=1 // pred_check
      _
    $region19: #{cnn_forward.1} parent=1 // pred_check_branch
      %397 = sbr.rel (0) target = $region21
    $region20: #{cnn_forward.1} parent=1 // pred_region
      %398 = dma.done [#allocation4], 32
    $region21: #{cnn_forward.1} parent=1 // pred_fallthru
      _
    %399 = vsyncpa [#allocation3], 1
    %400 = vsyncpa [#allocation4], 1

</llo_original>
